<compile_context>
chip_gen: v7x
topology: tpu7x:2x2x1
jax: 0.10.0
libtpu: 0.0.40
codegen_flags: <defaults>
</compile_context>

<pallas_src>
import functools

import jax
import jax.numpy as jnp
from jax.experimental import pallas as pl
from jax.experimental.pallas import tpu as pltpu


# ----------------------------- hardware-derived budgets -----------------------------

@functools.lru_cache(maxsize=None)
def _tpu_vmem_bytes():
    try:
        info = pltpu.get_tpu_info()
        for attr in ("vmem_capacity_bytes", "vmem_bytes", "vmem_size_bytes"):
            v = getattr(info, attr, None)
            if v:
                return int(v)
    except Exception:
        pass
    return 64 * 1024 * 1024          # conservative (v7x-sized) fallback


def _vmem_limit_bytes():
    # ~3/4 of physical VMEM: 48 MiB on v7x (64 MiB), 96 MiB on v5e/v6e (128 MiB).
    return int(min(_tpu_vmem_bytes() * 3 // 4, 112 * 1024 * 1024))


def _block_bytes_target():
    # bigger x/patch blocks on 128-MiB-VMEM parts (v5e/v6e), ~4 MiB on v7x.
    return 8 * 1024 * 1024 if _tpu_vmem_bytes() >= 96 * 1024 * 1024 else 4 * 1024 * 1024


# ----------------------------- Pallas kernels -----------------------------

def _mm_bias_act_kernel(*refs, act, has_res):
    """o = act(x @ w + b [+ res]); bf16 operands, f32 accumulate (encoder, NHWC)."""
    if has_res:
        x_ref, w_ref, b_ref, r_ref, o_ref = refs
    else:
        x_ref, w_ref, b_ref, o_ref = refs
        r_ref = None
    acc = jnp.dot(x_ref[...], w_ref[...], preferred_element_type=jnp.float32)
    acc = acc + b_ref[...].astype(jnp.float32)
    if r_ref is not None:
        acc = acc + r_ref[...].astype(jnp.float32)
    if act == "relu":
        acc = jnp.maximum(acc, 0.0)
    elif act == "sigmoid":
        acc = jax.nn.sigmoid(acc)
    o_ref[...] = acc.astype(o_ref.dtype)


def _cm_mm_bias_act_kernel(x_ref, w_ref, b_ref, o_ref, *, act):
    """o = act(w @ x + b); channel-major / lane-dense (decoder).

    w: (P, K) bf16, x: (K, tm) bf16, b: (P, 1) f32, o: (P, tm)."""
    acc = jnp.dot(w_ref[...], x_ref[...], preferred_element_type=jnp.float32)
    acc = acc + b_ref[...].astype(jnp.float32)
    if act == "relu":
        acc = jnp.maximum(acc, 0.0)
    elif act == "sigmoid":
        acc = jax.nn.sigmoid(acc)
    o_ref[...] = acc.astype(o_ref.dtype)


def _mean_over_axis1_kernel(x_ref, o_ref):
    o_ref[...] = jnp.mean(x_ref[...].astype(jnp.float32), axis=1).astype(o_ref.dtype)


# ----------------------------- encoder matmul (row-major, NHWC) --------------------

def matmul_bias_act(x, w, b, act="none", residual=None, out_dtype=jnp.bfloat16):
    """y = act(x @ w + b [+ residual]); x:(M,K), w:(K,N), b:(N,) -> (M,N).

    bf16 MXU operands, f32 accumulation.  Row tiles are exact divisors of M
    (no pad / slice copies); N split into 256-wide column tiles for the big
    weights.  Grid = (M-tiles, N-tiles), both "parallel"."""
    M, K = x.shape
    Kw, N = w.shape
    assert K == Kw
    xb = x.astype(jnp.bfloat16)
    wb = w.astype(jnp.bfloat16)
    b2 = b.reshape(1, N).astype(jnp.float32)
    rb = residual.astype(jnp.bfloat16) if residual is not None else None

    tn = 256 if (N > 256 and N % 256 == 0) else N

    budget = max(8, _block_bytes_target() // max(K * 2, 1))
    if M < 8:
        tm, Mp = 8, 8                      # tiny matmul: pad rows to one 8-row tile
    elif M <= budget:
        tm, Mp = M, M                      # single full-M tile, no padding
    else:
        tm = budget - budget % 8
        while tm > 8 and M % tm:
            tm -= 8
        Mp = M if M % tm == 0 else -(-M // tm) * tm   # fallback (unused here)

    if Mp != M:
        xb = jnp.pad(xb, ((0, Mp - M), (0, 0)))
        if rb is not None:
            rb = jnp.pad(rb, ((0, Mp - M), (0, 0)))

    inputs = [xb, wb, b2]
    in_specs = [
        pl.BlockSpec((tm, K), lambda i, j: (i, 0)),
        pl.BlockSpec((K, tn), lambda i, j: (0, j)),
        pl.BlockSpec((1, tn), lambda i, j: (0, j)),
    ]
    has_res = rb is not None
    if has_res:
        inputs.append(rb)
        in_specs.append(pl.BlockSpec((tm, tn), lambda i, j: (i, j)))

    out = pl.pallas_call(
        functools.partial(_mm_bias_act_kernel, act=act, has_res=has_res),
        out_shape=jax.ShapeDtypeStruct((Mp, N), out_dtype),
        grid=(Mp // tm, N // tn),
        in_specs=in_specs,
        out_specs=pl.BlockSpec((tm, tn), lambda i, j: (i, j)),
        compiler_params=pltpu.CompilerParams(
            dimension_semantics=("parallel", "parallel"),
            vmem_limit_bytes=_vmem_limit_bytes(),
        ),
    )(*inputs)
    return out if Mp == M else out[:M]


# ----------------------------- conv helpers (XLA glue + Pallas matmul) -------------

def _im2col(x, kh, kw, stride, pad):
    """x NHWC -> (N*Ho*Wo, kh*kw*C) patch matrix (tap-major columns)."""
    N, H, W, C = x.shape
    Ho = (H + 2 * pad - kh) // stride + 1
    Wo = (W + 2 * pad - kw) // stride + 1
    xp = jnp.pad(x, ((0, 0), (pad, pad), (pad, pad), (0, 0)))
    cols = []
    for i in range(kh):
        for j in range(kw):
            cols.append(xp[:, i:i + stride * Ho:stride, j:j + stride * Wo:stride, :])
    patches = jnp.concatenate(cols, axis=-1)          # (N, Ho, Wo, kh*kw*C)
    return patches.reshape(N * Ho * Wo, kh * kw * C), Ho, Wo


def conv2d(x, wmat, b, k, stride, pad, act="none", residual=None,
           out_dtype=jnp.bfloat16):
    """x NHWC; wmat (k*k*Cin, Cout) matmul-ready; b (Cout,)."""
    N, _, _, Cin = x.shape
    Cout = wmat.shape[1]
    if k == 1 and pad == 0:
        xs = x if stride == 1 else x[:, ::stride, ::stride, :]
        _, Ho, Wo, _ = xs.shape
        pat = xs.reshape(N * Ho * Wo, Cin)
    else:
        pat, Ho, Wo = _im2col(x, k, k, stride, pad)
    res2 = residual.reshape(N * Ho * Wo, Cout) if residual is not None else None
    y = matmul_bias_act(pat, wmat, b, act=act, residual=res2, out_dtype=out_dtype)
    return y.reshape(N, Ho, Wo, Cout)


def maxpool2d(x, k=3, stride=2, pad=1):
    """PyTorch MaxPool2d(3, 2, 1); pairwise max over shifted windows (no 9x stack)."""
    N, H, W, C = x.shape
    Ho = (H + 2 * pad - k) // stride + 1
    Wo = (W + 2 * pad - k) // stride + 1
    xp = jnp.pad(x, ((0, 0), (pad, pad), (pad, pad), (0, 0)),
                 constant_values=-jnp.inf)
    out = None
    for i in range(k):
        for j in range(k):
            win = xp[:, i:i + stride * Ho:stride, j:j + stride * Wo:stride, :]
            out = win if out is None else jnp.maximum(out, win)
    return out


def global_avgpool(x):
    """AdaptiveAvgPool2d((1,1)) + flatten: (N,H,W,C) -> (N,C).

    Ungridded: at this model size H*W == 1 (16x16 input), so the whole array
    is a few KB and fits a single VMEM block."""
    N, H, W, C = x.shape
    return pl.pallas_call(
        _mean_over_axis1_kernel,
        out_shape=jax.ShapeDtypeStruct((N, C), x.dtype),
    )(x.reshape(N, H * W, C))


# ----------------------------- decoder: lane-dense ConvTranspose --------------------

def _pick_col_tile(HW, K):
    """Largest power-of-two tile of the flattened spatial axis that divides HW
    and keeps the (K, tile) bf16 patch block near the per-chip byte target."""
    budget = max(128, _block_bytes_target() // max(K * 2, 1))
    t = 1
    while t * 2 <= min(HW, budget) and HW % (t * 2) == 0:
        t *= 2
    if HW % t:
        t = HW
    return t


def conv_transpose2d_subpixel(x_cm, w_t, b_col, act, out_dtype=jnp.bfloat16):
    """PyTorch ConvTranspose2d(k=4, s=2, p=1) in channel-major (NCHW) layout.

    Lowered as a 3x3/stride-1 sub-pixel conv: Y[n] = act(W_t @ patches[n] + b)
    with the big H*W axis in lanes (full-width stores) and 4*Cout in sublanes,
    followed by depth-to-space in XLA.  x_cm (N,Cin,H,W) -> (N,Cout,2H,2W)."""
    N, Cin, H, W = x_cm.shape
    P, K = w_t.shape                       # (4*Cout, 9*Cin)
    Cout = P // 4
    HW = H * W

    # channel-major im2col: (N, 9*Cin, H*W), tap-major rows (di, dj).
    xp = jnp.pad(x_cm, ((0, 0), (0, 0), (1, 1), (1, 1)))
    pat = jnp.concatenate(
        [xp[:, :, di:di + H, dj:dj + W] for di in range(3) for dj in range(3)],
        axis=1).reshape(N, K, HW)
    # TODO(synk): fold this tap gather + the depth-to-space below into the
    #             Pallas kernel (tap grid axis over a VMEM-resident padded
    #             image) so the 9x patch matrix never hits HBM.

    tm = _pick_col_tile(HW, K)
    out = pl.pallas_call(
        functools.partial(_cm_mm_bias_act_kernel, act=act),
        out_shape=jax.ShapeDtypeStruct((N, P, HW), out_dtype),
        grid=(N, HW // tm),
        in_specs=[
            pl.BlockSpec((None, K, tm), lambda n, j: (n, 0, j)),
            pl.BlockSpec((P, K), lambda n, j: (0, 0)),
            pl.BlockSpec((P, 1), lambda n, j: (0, 0)),
        ],
        out_specs=pl.BlockSpec((None, P, tm), lambda n, j: (n, 0, j)),
        compiler_params=pltpu.CompilerParams(
            dimension_semantics=("parallel", "parallel"),
            vmem_limit_bytes=_vmem_limit_bytes(),
        ),
    )(pat, w_t, b_col)

    # depth-to-space: rows of `out` are ordered (ph, pw, cout).
    y = out.reshape(N, 2, 2, Cout, H, W)
    y = jnp.transpose(y, (0, 3, 4, 1, 5, 2)).reshape(N, Cout, 2 * H, 2 * W)
    return y


# ----------------------------- parameters -----------------------------

class ParamGen:
    def __init__(self, key):
        self.key = key
        self.i = 0

    def normal(self, shape, std):
        self.i += 1
        k = jax.random.fold_in(self.key, self.i)
        return (std * jax.random.normal(k, shape)).astype(jnp.float32)


def conv_bn(pg, cout, cin, k):
    """Conv2d(bias=False) + eval-mode BatchNorm folded; matmul-ready bf16 weight."""
    fan_in = cin * k * k
    w = pg.normal((cout, cin, k, k), (2.0 / fan_in) ** 0.5)
    gamma = jnp.ones((cout,), jnp.float32)
    beta = jnp.zeros((cout,), jnp.float32)
    mean = jnp.zeros((cout,), jnp.float32)
    var = jnp.ones((cout,), jnp.float32)
    scale = gamma / jnp.sqrt(var + 1e-5)
    w = w * scale[:, None, None, None]
    b = beta - mean * scale
    wmat = jnp.transpose(w, (2, 3, 1, 0)).reshape(k * k * cin, cout)
    return wmat.astype(jnp.bfloat16), b


def build_resnet50_params(pg):
    params = {"conv1": conv_bn(pg, 64, 3, 7)}
    blocks, cfg = [], []
    cin = 64
    for (nblocks, width, stride) in [(3, 64, 1), (4, 128, 2), (6, 256, 2), (3, 512, 2)]:
        for bi in range(nblocks):
            s = stride if bi == 0 else 1
            has_down = (bi == 0)
            p = {}
            p["w1"], p["b1"] = conv_bn(pg, width, cin, 1)
            p["w2"], p["b2"] = conv_bn(pg, width, width, 3)
            p["w3"], p["b3"] = conv_bn(pg, width * 4, width, 1)
            if has_down:
                p["wd"], p["bd"] = conv_bn(pg, width * 4, cin, 1)
            blocks.append(p)
            cfg.append((s, has_down))
            cin = width * 4
    params["blocks"] = blocks
    # PyTorch nn.Linear stores (out, in) and computes x @ W.T; store the
    # transposed matmul-ready (in, out) copy.
    fc_w_torch = pg.normal((2048, 2048), (1.0 / 2048.0) ** 0.5)   # (out, in)
    params["fc_w"] = jnp.transpose(fc_w_torch).astype(jnp.bfloat16)
    params["fc_b"] = pg.normal((2048,), 0.01)
    return params, cfg


# (phase, 3x3-window offset) -> ConvTranspose kernel tap index (k=4, s=2, p=1)
_PHASE_TAP = {(0, 0): 3, (0, 1): 1, (1, 1): 2, (1, 2): 0}


def _ct_weight_to_subpixel(w_iokk):
    """ConvTranspose2d(k=4,s=2,p=1) weight (Cin,Cout,4,4) -> (9*Cin, 4*Cout)
    dense-conv weight: 3x3/stride-1 conv over the pad=1 input producing the
    four output phases (ph, pw) per input position (depth-to-space layout)."""
    cin, cout = w_iokk.shape[0], w_iokk.shape[1]
    row_blocks = []
    for di in range(3):
        for dj in range(3):
            cols = []
            for ph in range(2):
                for pw in range(2):
                    kh = _PHASE_TAP.get((ph, di))
                    kw = _PHASE_TAP.get((pw, dj))
                    if kh is None or kw is None:
                        cols.append(jnp.zeros((cin, cout), w_iokk.dtype))
                    else:
                        cols.append(w_iokk[:, :, kh, kw])
            row_blocks.append(jnp.concatenate(cols, axis=1))      # (Cin, 4*Cout)
    return jnp.concatenate(row_blocks, axis=0)                    # (9*Cin, 4*Cout)


def build_decoder_params(pg):
    chans = [128, 64, 48, 36, 24, 12, 6, 3]
    ps = []
    for cin, cout in zip(chans[:-1], chans[1:]):
        w = pg.normal((cin, cout, 4, 4), (1.0 / (cin * 16)) ** 0.5)
        b = pg.normal((cout,), 0.01)
        # lane-dense (transposed) matmul weight: (4*Cout, 9*Cin) bf16
        w_t = jnp.transpose(_ct_weight_to_subpixel(w)).astype(jnp.bfloat16)
        b_col = jnp.tile(b, 4).reshape(4 * cout, 1).astype(jnp.float32)
        ps.append((w_t, b_col))
    return ps


# ----------------------------- forward -----------------------------

def bottleneck_forward(x, p, stride, has_down):
    out = conv2d(x, p["w1"], p["b1"], 1, 1, 0, "relu")
    out = conv2d(out, p["w2"], p["b2"], 3, stride, 1, "relu")
    if has_down:
        idn = conv2d(x, p["wd"], p["bd"], 1, stride, 0, "none")
    else:
        idn = x
    # conv3 is 1x1/stride-1, so its rows line up with the identity tensor:
    # the residual add + ReLU is fused into the same Pallas matmul kernel.
    return conv2d(out, p["w3"], p["b3"], 1, 1, 0, "relu", residual=idn)


def autoencoder_forward(x_nchw, enc_params, dec_params, blocks_cfg):
    x = jnp.transpose(x_nchw, (0, 2, 3, 1)).astype(jnp.bfloat16)     # NHWC bf16
    # --- encoder: ResNet-50 (BN folded, eval mode) ---
    x = conv2d(x, enc_params["conv1"][0], enc_params["conv1"][1], 7, 2, 3, "relu")
    x = maxpool2d(x, 3, 2, 1)
    for p, (s, hd) in zip(enc_params["blocks"], blocks_cfg):
        x = bottleneck_forward(x, p, s, hd)
    x = global_avgpool(x)                                            # (N, 2048)
    encoded = matmul_bias_act(x, enc_params["fc_w"], enc_params["fc_b"],
                              act="none", out_dtype=jnp.float32)     # (N, 2048)
    # --- torch.reshape(encoded, (-1, 128, 4, 4)): NCHW == channel-major ---
    z = encoded.reshape(-1, 128, 4, 4).astype(jnp.bfloat16)
    # --- decoder: 7x ConvTranspose2d(4, stride=2, padding=1), lane-dense ---
    n_dec = len(dec_params)
    for li, (w_t, b_col) in enumerate(dec_params):
        last = li == n_dec - 1
        z = conv_transpose2d_subpixel(
            z, w_t, b_col,
            act="sigmoid" if last else "relu",
            out_dtype=jnp.float32 if last else jnp.bfloat16)
    decoded = z                                                      # NCHW f32
    return decoded, encoded


# ----------------------------- self-check for the ConvTranspose lowering ------------

def _ref_conv_transpose(x, w, b):
    """Direct-definition reference for ConvTranspose2d(k=4, s=2, p=1), NCHW f32."""
    N, Cin, H, W = x.shape
    Cout = w.shape[1]
    buf = jnp.zeros((N, Cout, 2 * H + 2, 2 * W + 2), jnp.float32)
    xf = x.astype(jnp.float32)
    for kh in range(4):
        for kw in range(4):
            contrib = jnp.einsum("nchw,cd->ndhw", xf,
                                 w[:, :, kh, kw].astype(jnp.float32))
            buf = buf.at[:, :, kh:kh + 2 * H:2, kw:kw + 2 * W:2].add(contrib)
    return buf[:, :, 1:1 + 2 * H, 1:1 + 2 * W] + b.reshape(1, Cout, 1, 1)


def _check_conv_transpose_lowering(key):
    cin, cout, H, W = 6, 3, 4, 4
    x = jax.random.normal(jax.random.fold_in(key, 0), (2, cin, H, W), jnp.float32)
    w = jax.random.normal(jax.random.fold_in(key, 1), (cin, cout, 4, 4), jnp.float32) * 0.2
    b = jax.random.normal(jax.random.fold_in(key, 2), (cout,), jnp.float32) * 0.1
    xb = x.astype(jnp.bfloat16).astype(jnp.float32)
    wb = w.astype(jnp.bfloat16).astype(jnp.float32)
    got = conv_transpose2d_subpixel(
        xb.astype(jnp.bfloat16),
        jnp.transpose(_ct_weight_to_subpixel(wb)).astype(jnp.bfloat16),
        jnp.tile(b, 4).reshape(4 * cout, 1).astype(jnp.float32),
        act="none", out_dtype=jnp.float32)
    ref = _ref_conv_transpose(xb, wb, b)
    err = float(jnp.max(jnp.abs(got - ref)))
    assert bool(jnp.allclose(got, ref, atol=5e-2, rtol=5e-2)), err


# ----------------------------- main -----------------------------

if __name__ == "__main__":
    key = jax.random.PRNGKey(0)
    pg = ParamGen(jax.random.fold_in(key, 1))
    enc_params, blocks_cfg = build_resnet50_params(pg)
    dec_params = build_decoder_params(pg)

    # validate the stride-phase ConvTranspose lowering against a reference
    _check_conv_transpose_lowering(jax.random.fold_in(key, 7))

    # small NCHW input, RGB 16x16, batch 2 (ResNet-50 expects 3 input channels)
    x = jax.random.normal(jax.random.fold_in(key, 2), (2, 3, 16, 16), jnp.float32)

    fwd = jax.jit(
        lambda xx, ep, dp: autoencoder_forward(xx, ep, dp, blocks_cfg)
    )
    decoded, encoded = fwd(x, enc_params, dec_params)
    jax.block_until_ready((decoded, encoded))

    assert decoded.shape == (2, 3, 512, 512), decoded.shape
    assert encoded.shape == (2, 2048), encoded.shape
    assert bool(jnp.isfinite(decoded).all()) and bool(jnp.isfinite(encoded).all())
    print("KERNEL_OK")
</pallas_src>

<mosaic_0001>
module attributes {stable_mosaic.version = 11 : i64} {
  func.func @_cm_mm_bias_act_kernel(%arg0: i32, %arg1: i32, %arg2: memref<1x54x16xbf16, #tpu.memory_space<vmem>>, %arg3: memref<12x54xbf16, #tpu.memory_space<vmem>>, %arg4: memref<12x1xf32, #tpu.memory_space<vmem>>, %arg5: memref<1x12x16xf32, #tpu.memory_space<vmem>>) attributes {dimension_semantics = [#tpu.dimension_semantics<parallel>, #tpu.dimension_semantics<parallel>], iteration_bounds = array<i64: 2, 1>, scalar_prefetch = 0 : i64, scratch_operands = 0 : i64, tpu.core_type = #tpu.core_type<tc>, window_params = [{transform_indices = @transform_0, window_bounds = array<i64: 1, 54, 16>}, {pipeline_mode = #tpu.pipeline_mode<synchronous>, transform_indices = @transform_1, window_bounds = array<i64: 12, 54>}, {pipeline_mode = #tpu.pipeline_mode<synchronous>, transform_indices = @transform_2, window_bounds = array<i64: 12, 1>}, {transform_indices = @transform_3, window_bounds = array<i64: 1, 12, 16>}]} {
    %c0 = arith.constant 0 : index
    %c0_0 = arith.constant 0 : index
    %0 = vector.load %arg3[%c0, %c0_0] : memref<12x54xbf16, #tpu.memory_space<vmem>>, vector<12x54xbf16>
    %c0_1 = arith.constant 0 : index
    %c0_2 = arith.constant 0 : index
    %c0_3 = arith.constant 0 : index
    %1 = vector.load %arg2[%c0_1, %c0_2, %c0_3] : memref<1x54x16xbf16, #tpu.memory_space<vmem>>, vector<1x54x16xbf16>
    %2 = vector.shape_cast %1 : vector<1x54x16xbf16> to vector<54x16xbf16>
    %cst = arith.constant dense<0.000000e+00> : vector<12x16xf32>
    %3 = tpu.matmul %0, %2, %cst {dimension_numbers = #tpu.dot_dimension_numbers<[1], [0], [0], [1], [0, 0, 1, 1], [], []>} : vector<12x54xbf16>, vector<54x16xbf16>, vector<12x16xf32> -> vector<12x16xf32>
    %c0_4 = arith.constant 0 : index
    %c0_5 = arith.constant 0 : index
    %4 = vector.load %arg4[%c0_4, %c0_5] : memref<12x1xf32, #tpu.memory_space<vmem>>, vector<12x1xf32>
    %5 = vector.broadcast %4 : vector<12x1xf32> to vector<12x16xf32>
    %6 = arith.addf %3, %5 : vector<12x16xf32>
    %c0_6 = arith.constant 0 : index
    %c0_7 = arith.constant 0 : index
    %c0_8 = arith.constant 0 : index
    %7 = vector.load %arg5[%c0_6, %c0_7, %c0_8] : memref<1x12x16xf32, #tpu.memory_space<vmem>>, vector<1x12x16xf32>
    %8 = vector.shape_cast %7 : vector<1x12x16xf32> to vector<12x16xf32>
    %9 = vector.shape_cast %6 : vector<12x16xf32> to vector<1x12x16xf32>
    tpu.vector_store %arg5[%c0_6, %c0_7, %c0_8], %9 {strides = array<i32>} : memref<1x12x16xf32, #tpu.memory_space<vmem>>, vector<1x12x16xf32>,
    return
  }
  func.func @transform_0(%arg0: i32, %arg1: i32) -> (i32, i32, i32) {
    %c0_i32 = arith.constant 0 : i32
    %c0_i32_0 = arith.constant 0 : i32
    return %arg0, %c0_i32, %arg1 : i32, i32, i32
  }
  func.func @transform_1(%arg0: i32, %arg1: i32) -> (i32, i32) {
    %c0_i32 = arith.constant 0 : i32
    %c0_i32_0 = arith.constant 0 : i32
    %c0_i32_1 = arith.constant 0 : i32
    return %c0_i32, %c0_i32_0 : i32, i32
  }
  func.func @transform_2(%arg0: i32, %arg1: i32) -> (i32, i32) {
    %c0_i32 = arith.constant 0 : i32
    %c0_i32_0 = arith.constant 0 : i32
    %c0_i32_1 = arith.constant 0 : i32
    return %c0_i32, %c0_i32_0 : i32, i32
  }
  func.func @transform_3(%arg0: i32, %arg1: i32) -> (i32, i32, i32) {
    %c0_i32 = arith.constant 0 : i32
    %c0_i32_0 = arith.constant 0 : i32
    return %arg0, %c0_i32, %arg1 : i32, i32, i32
  }
}

</mosaic_0001>

<llo_original>
// kernel: tpu_custom_call.1
$region0: #{tpu_custom_call.1}
  #allocation0 [shape = 'u32[]', space=smem, size = 0x4, offset = 0x4, fixed_abs, tag = 'smem constant byte address 0x4 - core index']
  #allocation1 [shape = 'u32[144,128]{1,0:T(1,128)}', space=vmem, size = 0x12000, scoped, tag = 'internal scratch']
  %s0 = inlined_call_operand.vmem [shape: bf16[2,54,16], index: 0, kind: input, shape index: {}]
  %s1 = inlined_call_operand.vmem [shape: bf16[12,54], index: 1, kind: input, shape index: {}]
  %s2 = inlined_call_operand.vmem [shape: f32[12,1], index: 2, kind: input, shape index: {}]
  %s3 = inlined_call_operand.vmem [shape: f32[2,12,16], index: 3, kind: output, shape index: {}]
  %s4 = sld [smem:[#allocation0]]
  $region45: #{tpu_custom_call.1} parent=0
    _
  %s6 = ssub.s32 1, %s4
  %s7 = scalar_select 0, %s6, %s4
  loop: start=0, step=1, limit=4
  $region2: #{tpu_custom_call.1} parent=0 // loop_pre_header
    _
  $region3: #{tpu_custom_call.1} parent=0 // loop_header
    %s9 = sphi 0, %s13
    %p10 = scmp.ge.s32.totalorder %s9, 4
    %s16 = sphi 0, %s28
    %s17 = sphi 0, %s24
    %s18 = sphi 0, %s16
    %s19 = sphi 0, %s17
    %s20 = sphi 0, %s18
    %s21 = sphi 0, %s19
    %s33 = sphi 0, %s35
    %s36 = sphi 0, %s33
    %s37 = sphi 0, %s36
    %s53 = sphi 0, %s37
    %s57 = sphi 0, %s57
    %s59 = sphi 0, %s57
    %s60 = sphi 0, %s59
    %s74 = sphi 0, %s60
    %s78 = sphi 0, %s78
    %s80 = sphi 0, %s78
    %s81 = sphi 0, %s80
    %s95 = sphi 0, %s81
    %s103 = sphi 0, %s105
    %s106 = sphi 0, %s103
    %s107 = sphi 0, %s106
    %s123 = sphi 0, %s107
  $region4: #{tpu_custom_call.1} parent=0 // loop_header_branch
    %12 = sbr.rel (%p10) target = $region8
  $region5: #{tpu_custom_call.1} parent=0 // loop_body
    %s14 = ssub.s32 %s9, 1
    %s15 = ssub.s32 %s9, 2
    %s22 = sadd.s32 1, %s17
    %p23 = scmp.ge.s32.totalorder %s22, 1
    %s24 = scalar_select %p23, 0, %s22
    %s25 = sadd.s32 1, %s16
    %s26 = scalar_select %p23, %s25, %s16
    %p27 = scmp.ge.s32.totalorder %s26, 2
    %s28 = scalar_select %p27, 0, %s26
    %s29 = ssub.s32 %s16, %s28
    %s30 = ssub.s32 %s17, %s24
    %s31 = sor.u32 %s29, %s30
    %p32 = scmp.eq.s32.totalorder %s31, 0
    %s34 = sadd.s32 %s33, 1
    %s35 = scalar_select %p32, %s33, %s34
    %p38 = pneg %p32
    %p39 = scmp.eq.s32.totalorder %s9, 1
    %p40 = por %p38, %p39
    %p41 = scmp.ne.s32.totalorder %s33, %s36
    %p42 = scmp.eq.s32.totalorder %s9, 0
    %p43 = por %p41, %p42
    %p44 = scmp.ne.s32.totalorder %s33, %s36
    %p45 = scmp.eq.s32.totalorder %s14, 1
    %p46 = por %p44, %p45
    %p47 = scmp.ne.s32.totalorder %s36, %s37
    %p48 = scmp.eq.s32.totalorder %s14, 0
    %p49 = por %p47, %p48
    %p50 = scmp.ne.s32.totalorder %s36, %s37
    %p51 = scmp.eq.s32.totalorder %s15, 1
    %p52 = por %p50, %p51
    %p54 = scmp.ne.s32.totalorder %s37, %s53
    %p55 = scmp.eq.s32.totalorder %s15, 0
    %p56 = por %p54, %p55
    %s58 = sadd.s32 %s57, 1
    %p61 = scmp.eq.s32.totalorder %s9, 1
    %p62 = scmp.ne.s32.totalorder %s57, %s59
    %p63 = scmp.eq.s32.totalorder %s9, 0
    %p64 = por %p62, %p63
    %p65 = scmp.ne.s32.totalorder %s57, %s59
    %p66 = scmp.eq.s32.totalorder %s14, 1
    %p67 = por %p65, %p66
    %p68 = scmp.ne.s32.totalorder %s59, %s60
    %p69 = scmp.eq.s32.totalorder %s14, 0
    %p70 = por %p68, %p69
    %p71 = scmp.ne.s32.totalorder %s59, %s60
    %p72 = scmp.eq.s32.totalorder %s15, 1
    %p73 = por %p71, %p72
    %p75 = scmp.ne.s32.totalorder %s60, %s74
    %p76 = scmp.eq.s32.totalorder %s15, 0
    %p77 = por %p75, %p76
    %s79 = sadd.s32 %s78, 1
    %p82 = scmp.eq.s32.totalorder %s9, 1
    %p83 = scmp.ne.s32.totalorder %s78, %s80
    %p84 = scmp.eq.s32.totalorder %s9, 0
    %p85 = por %p83, %p84
    %p86 = scmp.ne.s32.totalorder %s78, %s80
    %p87 = scmp.eq.s32.totalorder %s14, 1
    %p88 = por %p86, %p87
    %p89 = scmp.ne.s32.totalorder %s80, %s81
    %p90 = scmp.eq.s32.totalorder %s14, 0
    %p91 = por %p89, %p90
    %p92 = scmp.ne.s32.totalorder %s80, %s81
    %p93 = scmp.eq.s32.totalorder %s15, 1
    %p94 = por %p92, %p93
    %p96 = scmp.ne.s32.totalorder %s81, %s95
    %p97 = scmp.eq.s32.totalorder %s15, 0
    %p98 = por %p96, %p97
    %s99 = ssub.s32 %s16, %s28
    %s100 = ssub.s32 %s17, %s24
    %s101 = sor.u32 %s99, %s100
    %p102 = scmp.eq.s32.totalorder %s101, 0
    %s104 = sadd.s32 %s103, 1
    %s105 = scalar_select %p102, %s103, %s104
    %p108 = pneg %p102
    %p109 = scmp.eq.s32.totalorder %s9, 1
    %p110 = por %p108, %p109
    %p111 = scmp.ne.s32.totalorder %s103, %s106
    %p112 = scmp.eq.s32.totalorder %s9, 0
    %p113 = por %p111, %p112
    %p114 = scmp.ne.s32.totalorder %s103, %s106
    %p115 = scmp.eq.s32.totalorder %s14, 1
    %p116 = por %p114, %p115
    %p117 = scmp.ne.s32.totalorder %s106, %s107
    %p118 = scmp.eq.s32.totalorder %s14, 0
    %p119 = por %p117, %p118
    %p120 = scmp.ne.s32.totalorder %s106, %s107
    %p121 = scmp.eq.s32.totalorder %s15, 1
    %p122 = por %p120, %p121
    %p124 = scmp.ne.s32.totalorder %s107, %s123
    %p125 = scmp.eq.s32.totalorder %s15, 0
    %p126 = por %p124, %p125
    %p127 = scmp.le.s32.totalorder 1, %s9
    %p128 = scmp.lt.s32.totalorder %s9, 3
    %p129 = pnand %p127, %p128
    %p130 = pneg %p129
    // Predicated region
    $region9: #{tpu_custom_call.1} parent=5 // pred_check
      _
    $region10: #{tpu_custom_call.1} parent=5 // pred_check_branch
      %132 = sbr.rel (%p129) target = $region12
    $region11: #{tpu_custom_call.1} parent=5 // pred_region
      %s133 = ssub.s32 %s9, 1
      // Predicated region
      $region13: #{tpu_custom_call.1} parent=11 // pred_check
        %p134 = pneg %p70
      $region14: #{tpu_custom_call.1} parent=11 // pred_check_branch
        %136 = sbr.rel (%p134) target = $region16
      $region15: #{tpu_custom_call.1} parent=11 // pred_region
        _
      $region16: #{tpu_custom_call.1} parent=11 // pred_fallthru
        _
      // Predicated region
      $region17: #{tpu_custom_call.1} parent=11 // pred_check
        %p137 = pneg %p91
      $region18: #{tpu_custom_call.1} parent=11 // pred_check_branch
        %139 = sbr.rel (%p137) target = $region20
      $region19: #{tpu_custom_call.1} parent=11 // pred_region
        _
      $region20: #{tpu_custom_call.1} parent=11 // pred_fallthru
        _
    $region12: #{tpu_custom_call.1} parent=5 // pred_fallthru
      _
    %p140 = scmp.lt.s32.totalorder %s9, 2
    // Predicated region
    $region21: #{tpu_custom_call.1} parent=5 // pred_check
      %p141 = pneg %p140
    $region22: #{tpu_custom_call.1} parent=5 // pred_check_branch
      %143 = sbr.rel (%p141) target = $region24
    $region23: #{tpu_custom_call.1} parent=5 // pred_region
      // Predicated region
      $region25: #{tpu_custom_call.1} parent=23 // pred_check
        %p144 = pneg %p43
      $region26: #{tpu_custom_call.1} parent=23 // pred_check_branch
        %146 = sbr.rel (%p144) target = $region28
      $region27: #{tpu_custom_call.1} parent=23 // pred_region
        %p147 = scmp.lt.s32.totalorder %s16, 1
        %s148 = scalar_select %p147, %s16, 1
        %p149 = scmp.lt.s32.totalorder %s17, 0
        %s150 = scalar_select %p149, %s17, 0
        %s151 = smul.addr %s148, 7
        %s152 = sadd.s32 %s150, %s151
        %s153 = smul.addr %s152, 4
        %s154 = scalar_lea.vmem %s0, %s153
      $region28: #{tpu_custom_call.1} parent=23 // pred_fallthru
        _
    $region24: #{tpu_custom_call.1} parent=5 // pred_fallthru
      _
    %p155 = scmp.le.s32.totalorder 1, %s9
    %p156 = scmp.lt.s32.totalorder %s9, 3
    %p157 = pnand %p155, %p156
    %p158 = pneg %p157
    // Predicated region
    $region29: #{tpu_custom_call.1} parent=5 // pred_check
      _
    $region30: #{tpu_custom_call.1} parent=5 // pred_check_branch
      %160 = sbr.rel (%p157) target = $region32
    $region31: #{tpu_custom_call.1} parent=5 // pred_region
      %s161 = ssub.s32 %s9, 1
      %p162 = scmp.lt.s32.totalorder %s18, 1
      %s163 = scalar_select %p162, %s18, 1
      %p164 = scmp.lt.s32.totalorder %s19, 0
      %s165 = scalar_select %p164, %s19, 0
      %s166 = smul.addr %s163, 7
      %s167 = sadd.s32 %s165, %s166
      %s168 = smul.addr %s167, 4
      %s169 = scalar_lea.vmem %s0, %s168
      %p170 = pneg %p49
      %p171 = pneg %p46
      %p172 = pneg %p70
      %p173 = pneg %p67
      %p174 = pneg %p91
      %p175 = pneg %p88
      %p176 = pneg %p119
      %p177 = pneg %p116
      %p178 = scmp.lt.s32.totalorder %s18, 1
      %s179 = scalar_select %p178, %s18, 1
      %p180 = scmp.lt.s32.totalorder %s19, 0
      %s181 = scalar_select %p180, %s19, 0
      %s182 = smul.addr %s179, 2
      %s183 = sadd.s32 %s181, %s182
      %s184 = smul.addr %s183, 8
      %s185 = scalar_lea.vmem %s3, %s184
      %p186 = scmp.lt.s32.totalorder %s18, 1
      %s187 = scalar_select %p186, %s18, 1
      %p188 = scmp.lt.s32.totalorder %s19, 0
      %s189 = scalar_select %p188, %s19, 0
      %s190 = smul.addr %s187, 7
      %s191 = sadd.s32 %s189, %s190
      %s192 = smul.addr %s191, 4
      %s193 = scalar_lea.vmem %s0, %s192
      %p194 = scmp.lt.s32.totalorder %s18, 1
      %s195 = scalar_select %p194, %s18, 1
      %p196 = scmp.lt.s32.totalorder %s19, 0
      %s197 = scalar_select %p196, %s19, 0
      %s198 = smul.addr %s195, 2
      %s199 = sadd.s32 %s197, %s198
      %s200 = smul.addr %s199, 8
      %s201 = scalar_lea.vmem %s3, %s200
      %v203 = vld [vmem:[%s1] sm:$0xf]
      %v204 = vld [vmem:[%s1 + $0x4] sm:$0x3]
      %v205 = vld [vmem:[%s193] sm:$0xf]
      %v206 = vld [vmem:[%s193 + $0x4] sm:$0xf]
      %v207 = vld [vmem:[%s193 + $0x8] sm:$0xf]
      %v208 = vld [vmem:[%s193 + $0xc] sm:$0xf]
      %v209 = vld [vmem:[%s193 + $0x10] sm:$0xf]
      %v210 = vld [vmem:[%s193 + $0x14] sm:$0xf]
      %v211 = vld [vmem:[%s193 + $0x18] sm:$0x7]
      %v212 = vld [vmem:[%s2] sm:$0xff]
      %v213 = vld [vmem:[%s2 + $0x8] sm:$0xf]
      %215 = vset.pattern.permute.xlu0 0
      %216 = vperm.xlu0 %215, %v212
      %v217 = vpop.permute.xlu0 %216
      %220 = vset.pattern.permute.xlu0 0
      %221 = vperm.xlu0 %220, %v213
      %v222 = vpop.permute.xlu0 %221
      %v226 = vunpack.c.l.b16 %v203
      %v227 = vunpack.c.l.b16 %v204
      %v228 = vpack.c.b16 %v227, %v226
      %v236 = vunpack.c.l.b16 %v205
      %v237 = vunpack.c.l.b16 %v206
      %v238 = vunpack.c.l.b16 %v207
      %v239 = vunpack.c.l.b16 %v208
      %v240 = vunpack.c.l.b16 %v209
      %v241 = vunpack.c.l.b16 %v210
      %v242 = vunpack.c.l.b16 %v211
      %v243 = vpack.c.b16 %v237, %v236
      %v244 = vpack.c.b16 %v239, %v238
      %v245 = vpack.c.b16 %v241, %v240
      %v246 = vpack.c.b16 %v242, %v242
      %vm250 = vcmask 441344
      %v252 = vsel %vm250, %v228, 0
      %vm254 = vcmask 1042432
      %v256 = vsel %vm254, %v246, 0
      %258 = vmatprep.subr.bf16.mxu0 0
      %259 = vmatpush1.bf16.msra.mxu0 %v243
      %260 = vmatprep.subr.bf16.mxu0 0
      %261 = vmatpush1.bf16.msra.mxu0 %v244
      %262 = vmatprep.subr.bf16.mxu0 0
      %263 = vmatpush1.bf16.msra.mxu0 %v245
      %264 = vmatprep.subr.bf16.mxu0 0
      %265 = vmatpush1.bf16.msra.mxu0 %v256
      %266 = vmatprep.subr.bf16.mxu0 0
      %267 = vmatpush1.bf16.msra.mxu0 0
      %268 = vmatprep.subr.bf16.mxu0 0
      %269 = vmatpush1.bf16.msra.mxu0 0
      %270 = vmatprep.subr.bf16.mxu0 0
      %271 = vmatpush1.bf16.msra.mxu0 0
      %272 = vmatprep.subr.bf16.mxu0 0
      %273 = vmatpush1.bf16.msra.mxu0 0
      %274 = vmatprep.subr.bf16.mxu0 0
      %275 = vmatpush1.bf16.msra.mxu0 0
      %276 = vmatprep.subr.bf16.mxu0 0
      %277 = vmatpush1.bf16.msra.mxu0 0
      %278 = vmatprep.subr.bf16.mxu0 0
      %279 = vmatpush1.bf16.msra.mxu0 0
      %280 = vmatprep.subr.bf16.mxu0 0
      %281 = vmatpush1.bf16.msra.mxu0 0
      %282 = vmatprep.subr.bf16.mxu0 0
      %283 = vmatpush1.bf16.msra.mxu0 0
      %284 = vmatprep.subr.bf16.mxu0 0
      %285 = vmatpush1.bf16.msra.mxu0 0
      %286 = vmatprep.subr.bf16.mxu0 0
      %287 = vmatpush1.bf16.msra.mxu0 0
      %288 = vmatprep.subr.bf16.mxu0 0
      %289 = vmatpush1.bf16.msra.mxu0 0
      %290 = vmatprep.mubr.bf16.mxu0 0
      %291 = vmatmul.mubr.bf16.gmra.mrb[0].mxu0 %v252
      %v292 = vpop.f32.mrb[0].mxu0
      %v293 = vadd.f32 %v217, %v292
      %v294 = vpop.f32.mrb[0].mxu0
      %v295 = vpop.f32.mrb[0].mxu0
      %v296 = vadd.f32 %v222, %v295
      %v297 = vpop.f32.mrb[0].mxu0
      %298 = vdwg.mxu0
      %vm299 = vcmask 130048
      %300 = vst.msk [vmem:[%s201] sm:$0xff] %vm299, %v293
      %vm301 = vcmask 125952
      %302 = vst.msk [vmem:[%s201 + $0x8] sm:$0xf] %vm301, %v296
      %p303 = scmp.lt.s32.totalorder %s18, 1
      %s304 = scalar_select %p303, %s18, 1
      %p305 = scmp.lt.s32.totalorder %s19, 0
      %s306 = scalar_select %p305, %s19, 0
      %s307 = smul.addr %s304, 2
      %s308 = sadd.s32 %s306, %s307
      %s309 = smul.addr %s308, 8
      %s310 = scalar_lea.vmem %s3, %s309
      // Predicated region
      $region33: #{tpu_custom_call.1} parent=31 // pred_check
        %p311 = pneg %p116
      $region34: #{tpu_custom_call.1} parent=31 // pred_check_branch
        %313 = sbr.rel (%p311) target = $region36
      $region35: #{tpu_custom_call.1} parent=31 // pred_region
        _
      $region36: #{tpu_custom_call.1} parent=31 // pred_fallthru
        _
    $region32: #{tpu_custom_call.1} parent=5 // pred_fallthru
      _
    %p314 = scmp.le.s32.totalorder 2, %s9
    // Predicated region
    $region37: #{tpu_custom_call.1} parent=5 // pred_check
      %p315 = pneg %p314
    $region38: #{tpu_custom_call.1} parent=5 // pred_check_branch
      %317 = sbr.rel (%p315) target = $region40
    $region39: #{tpu_custom_call.1} parent=5 // pred_region
      %s318 = ssub.s32 %s9, 2
      // Predicated region
      $region41: #{tpu_custom_call.1} parent=39 // pred_check
        %p319 = pneg %p122
      $region42: #{tpu_custom_call.1} parent=39 // pred_check_branch
        %321 = sbr.rel (%p319) target = $region44
      $region43: #{tpu_custom_call.1} parent=39 // pred_region
        %p322 = scmp.lt.s32.totalorder %s20, 1
        %s323 = scalar_select %p322, %s20, 1
        %p324 = scmp.lt.s32.totalorder %s21, 0
        %s325 = scalar_select %p324, %s21, 0
        %s326 = smul.addr %s323, 2
        %s327 = sadd.s32 %s325, %s326
        %s328 = smul.addr %s327, 8
        %s329 = scalar_lea.vmem %s3, %s328
      $region44: #{tpu_custom_call.1} parent=39 // pred_fallthru
        _
    $region40: #{tpu_custom_call.1} parent=5 // pred_fallthru
      _
  $region6: #{tpu_custom_call.1} parent=0 // loop_footer
    %s13 = sadd.s32 1, %s9
  $region7: #{tpu_custom_call.1} parent=0 // loop_footer_branch
    %8 = sbr.rel target = $region3
  $region8: #{tpu_custom_call.1} parent=0 // loop_exit
    _

</llo_original>
